<compile_context>
chip_gen: v5e
topology: v5e:2x2
jax: 0.10.0
libtpu: 0.0.40
codegen_flags: <defaults>
</compile_context>

<pallas_src>
import jax
import jax.numpy as jnp
from jax.experimental import pallas as pl
from jax.experimental.pallas import tpu as pltpu


# ---------------------------------------------------------------------------
# Kernels
# ---------------------------------------------------------------------------
def _linear_kernel_single(x_ref, w_ref, b_ref, o_ref):
    # Single K step: fused dot + bias, straight to the output block.
    # x_ref: (tm, tk)  w_ref: (tk, tn)  b_ref: (1, tn)  o_ref: (tm, tn)
    o_ref[...] = (
        jnp.dot(x_ref[...], w_ref[...], preferred_element_type=jnp.float32)
        + b_ref[...].astype(jnp.float32)
    ).astype(o_ref.dtype)


def _linear_kernel_acc_out(x_ref, w_ref, b_ref, o_ref):
    # Multi-K, f32 output: accumulate directly into the (VMEM-resident)
    # output block -- no scratch, no final copy-out pass.
    k = pl.program_id(2)

    @pl.when(k == 0)
    def _():
        o_ref[...] = jnp.broadcast_to(b_ref[...].astype(o_ref.dtype), o_ref.shape)

    o_ref[...] += jnp.dot(x_ref[...], w_ref[...], preferred_element_type=jnp.float32)


def _linear_kernel_acc_scratch(x_ref, w_ref, b_ref, o_ref, acc_ref):
    # Multi-K, non-f32 output: f32 scratch accumulator, bias fused at the end.
    k = pl.program_id(2)

    @pl.when(k == 0)
    def _():
        acc_ref[...] = jnp.zeros_like(acc_ref)

    acc_ref[...] += jnp.dot(x_ref[...], w_ref[...], preferred_element_type=jnp.float32)

    @pl.when(k == pl.num_programs(2) - 1)
    def _():
        o_ref[...] = (acc_ref[...] + b_ref[...].astype(jnp.float32)).astype(o_ref.dtype)


# ---------------------------------------------------------------------------
# Planning helpers
# ---------------------------------------------------------------------------
def _round_up(x, m):
    return (x + m - 1) // m * m


def _sublane_multiple(dtype):
    size = jnp.dtype(dtype).itemsize
    if size >= 4:
        return 8
    if size == 2:
        return 16
    return 32


def _largest_aligned_divisor(total, align, cap):
    """Largest multiple of `align` dividing `total` and <= cap; 0 if none."""
    t = (min(cap, total) // align) * align
    while t >= align:
        if total % t == 0:
            return t
        t -= align
    return 0


def _tpu_info():
    kind = ""
    try:
        kind = jax.devices()[0].device_kind.lower()
    except Exception:
        pass
    vmem_cap = None
    try:
        vmem_cap = int(pltpu.get_tpu_info().vmem_capacity_bytes)
    except Exception:
        vmem_cap = None
    if vmem_cap is None or vmem_cap <= 0:
        vmem_cap = (64 << 20) if "v7" in kind else (128 << 20)
    mxu_align = 128 if any(g in kind for g in ("v2", "v3", "v4", "v5")) else 256
    return vmem_cap, mxu_align, kind


def prepare_text_classifier_params(weight, bias, x_dtype=jnp.float32, *,
                                   tm_cap=1024, tn_cap=1024):
    """One-time parameter prep (pad + transpose) and tile planning.

    weight: (num_classes, input_dim)  [PyTorch nn.Linear layout]
    bias:   (num_classes,)
    """
    C, D = weight.shape
    vmem_cap, mxu_align, kind = _tpu_info()
    sub_m = _sublane_multiple(x_dtype)

    # Lane-dense class axis for unmasked output stores.
    # TODO(synk): for C << 128 on v5e an unpadded (masked-store) output may win
    # on HBM write bytes -- benchmark both if that path matters.
    C_pad = _round_up(C, 128)
    tn = (_largest_aligned_divisor(C_pad, mxu_align, tn_cap)
          or _largest_aligned_divisor(C_pad, 128, tn_cap)
          or C_pad)

    x_b = jnp.dtype(x_dtype).itemsize
    w_b = jnp.dtype(weight.dtype).itemsize
    o_b = x_b
    budget = vmem_cap // 2

    tm = max(_round_up(tm_cap, sub_m), sub_m)
    while True:
        fixed = 2 * tm * tn * o_b + tm * tn * 4 + 2 * tn * 4  # out dbuf + acc + bias
        per_k = 2 * (tm * x_b + tn * w_b)
        tk_budget = max((budget - fixed) // per_k, 0)
        if tk_budget >= 128 or tm <= sub_m:
            break
        tm = max(_round_up(tm // 2, sub_m), sub_m)

    if tk_budget >= D:
        tk, D_pad = D, D                     # W^T fully K-resident, single K step
    else:
        k_align = mxu_align if D >= mxu_align else 128
        tk = (_largest_aligned_divisor(D, k_align, tk_budget)
              or _largest_aligned_divisor(D, 128, tk_budget))
        if tk == 0:                          # no aligned divisor fits: pad K
            tk = max((tk_budget // 128) * 128, 128)
            D_pad = _round_up(D, tk)
        else:
            D_pad = D

    # Hoisted per-call parameter prep: pad + transpose W, pad bias, once.
    w_t = jnp.pad(weight, ((0, C_pad - C), (0, D_pad - D))).T      # (D_pad, C_pad)
    b2d = jnp.pad(bias, (0, C_pad - C)).reshape(1, C_pad)

    return dict(w_t=w_t, b2d=b2d, C=C, D=D, D_pad=D_pad, C_pad=C_pad,
                tm=tm, tn=tn, tk=tk, sub_m=sub_m, vmem_cap=vmem_cap, kind=kind)


# ---------------------------------------------------------------------------
# Forward
# ---------------------------------------------------------------------------
def text_classifier_forward(x, params):
    p = params
    D, C, D_pad, C_pad = p["D"], p["C"], p["D_pad"], p["C_pad"]
    tn, tk, sub_m = p["tn"], p["tk"], p["sub_m"]

    orig_shape = x.shape
    assert orig_shape[-1] == D, "last dim of x must equal input_dim"
    x2d = x.reshape(-1, D)
    M = x2d.shape[0]

    tm = min(p["tm"], max(_round_up(M, sub_m), sub_m))
    m_tiles = pl.cdiv(M, tm)
    n_tiles = C_pad // tn
    k_tiles = D_pad // tk

    # v7x megacore: guarantee >= 2 parallel tiles when the problem allows it.
    if "v7" in p["kind"] and m_tiles == 1 and n_tiles == 1 and M >= 2 * sub_m:
        tm = max(_round_up(-(-M // 2), sub_m), sub_m)
        m_tiles = pl.cdiv(M, tm)

    # Never pad M; pad K only when the plan actually tiled a non-divisible D.
    x_p = x2d if D_pad == D else jnp.pad(x2d, ((0, 0), (0, D_pad - D)))

    # Loop order: keep whichever of {x, W^T} would be re-read the most resident
    # across the outer grid axis (index-unchanged blocks skip re-DMA).
    x_bytes = M * D_pad * jnp.dtype(x.dtype).itemsize
    w_bytes = D_pad * C_pad * jnp.dtype(p["w_t"].dtype).itemsize
    n_outer = x_bytes * (n_tiles - 1) <= w_bytes * (m_tiles - 1)

    if n_outer:
        grid = (n_tiles, m_tiles, k_tiles)
        x_map = lambda j, i, k: (i, k)
        w_map = lambda j, i, k: (k, j)
        b_map = lambda j, i, k: (0, j)
        o_map = lambda j, i, k: (i, j)
    else:
        grid = (m_tiles, n_tiles, k_tiles)
        x_map = lambda i, j, k: (i, k)
        w_map = lambda i, j, k: (k, j)
        b_map = lambda i, j, k: (0, j)
        o_map = lambda i, j, k: (i, j)

    out_dtype = x.dtype
    if k_tiles == 1:
        kernel, scratch = _linear_kernel_single, []
    elif jnp.dtype(out_dtype) == jnp.dtype(jnp.float32):
        kernel, scratch = _linear_kernel_acc_out, []
    else:
        kernel, scratch = _linear_kernel_acc_scratch, [pltpu.VMEM((tm, tn), jnp.float32)]

    x_b = jnp.dtype(x.dtype).itemsize
    w_b = jnp.dtype(p["w_t"].dtype).itemsize
    b_b = jnp.dtype(p["b2d"].dtype).itemsize
    o_b = jnp.dtype(out_dtype).itemsize
    need = (2 * tm * tk * x_b + 2 * tk * tn * w_b + 2 * tn * b_b
            + 2 * tm * tn * o_b + (tm * tn * 4 if scratch else 0))
    vmem_limit = max(need + (8 << 20), 32 << 20)
    vmem_limit = max(min(vmem_limit, p["vmem_cap"]), need)   # never below true need

    out2d = pl.pallas_call(
        kernel,
        out_shape=jax.ShapeDtypeStruct((M, C_pad), out_dtype),
        grid_spec=pltpu.PrefetchScalarGridSpec(
            num_scalar_prefetch=0,
            grid=grid,
            in_specs=[
                pl.BlockSpec((tm, tk), x_map),      # activation tile
                pl.BlockSpec((tk, tn), w_map),      # W^T tile (resident when possible)
                pl.BlockSpec((1, tn), b_map),       # bias tile
            ],
            out_specs=pl.BlockSpec((tm, tn), o_map),
            scratch_shapes=scratch,
        ),
        compiler_params=pltpu.CompilerParams(
            dimension_semantics=("parallel", "parallel", "arbitrary"),
            vmem_limit_bytes=int(vmem_limit),
        ),
    )(x_p, p["w_t"], p["b2d"])

    return out2d[:, :C].reshape(*orig_shape[:-1], C)


# ---------------------------------------------------------------------------
# Demo / self-test
# ---------------------------------------------------------------------------
if __name__ == "__main__":
    # Small shapes consistent with the module: (batch, seq, input_dim)
    batch, seq, input_dim, num_classes = 2, 8, 32, 16

    key = jax.random.PRNGKey(0)
    kx, kw, kb = jax.random.split(key, 3)

    x = jax.random.normal(kx, (batch, seq, input_dim), dtype=jnp.float32)

    # Deterministic parameter init (mimics nn.Linear uniform(-1/sqrt(D), 1/sqrt(D)))
    bound = 1.0 / (input_dim ** 0.5)
    weight = jax.random.uniform(kw, (num_classes, input_dim),
                                minval=-bound, maxval=bound, dtype=jnp.float32)
    bias = jax.random.uniform(kb, (num_classes,),
                              minval=-bound, maxval=bound, dtype=jnp.float32)

    # One-time parameter prep (hoisted out of the forward path).
    params = prepare_text_classifier_params(weight, bias, x.dtype)

    out = text_classifier_forward(x, params)
    out = jax.block_until_ready(out)

    # Reference check against plain-JAX linear
    ref = x @ weight.T + bias
    assert out.shape == (batch, seq, num_classes)
    assert jnp.allclose(out, ref, atol=1e-5, rtol=1e-5)

    print("KERNEL_OK")
</pallas_src>

<mosaic_0001>
module attributes {stable_mosaic.version = 11 : i64} {
  func.func @_linear_kernel_single(%arg0: i32, %arg1: i32, %arg2: i32, %arg3: memref<16x32xf32, #tpu.memory_space<vmem>>, %arg4: memref<32x128xf32, #tpu.memory_space<vmem>>, %arg5: memref<1x128xf32, #tpu.memory_space<vmem>>, %arg6: memref<16x128xf32, #tpu.memory_space<vmem>>) attributes {dimension_semantics = [#tpu.dimension_semantics<parallel>, #tpu.dimension_semantics<parallel>, #tpu.dimension_semantics<arbitrary>], iteration_bounds = array<i64: 1, 1, 1>, scalar_prefetch = 0 : i64, scratch_operands = 0 : i64, tpu.core_type = #tpu.core_type<tc>, window_params = [{transform_indices = @transform_0, window_bounds = array<i64: 16, 32>}, {transform_indices = @transform_1, window_bounds = array<i64: 32, 128>}, {transform_indices = @transform_2, window_bounds = array<i64: 1, 128>}, {transform_indices = @transform_3, window_bounds = array<i64: 16, 128>}]} {
    %c0 = arith.constant 0 : index
    %c0_0 = arith.constant 0 : index
    %0 = vector.load %arg3[%c0, %c0_0] : memref<16x32xf32, #tpu.memory_space<vmem>>, vector<16x32xf32>
    %c0_1 = arith.constant 0 : index
    %c0_2 = arith.constant 0 : index
    %1 = vector.load %arg4[%c0_1, %c0_2] : memref<32x128xf32, #tpu.memory_space<vmem>>, vector<32x128xf32>
    %cst = arith.constant dense<0.000000e+00> : vector<16x128xf32>
    %2 = tpu.matmul %0, %1, %cst {dimension_numbers = #tpu.dot_dimension_numbers<[1], [0], [0], [1], [0, 0, 1, 1], [], []>} : vector<16x32xf32>, vector<32x128xf32>, vector<16x128xf32> -> vector<16x128xf32>
    %c0_3 = arith.constant 0 : index
    %c0_4 = arith.constant 0 : index
    %3 = vector.load %arg5[%c0_3, %c0_4] : memref<1x128xf32, #tpu.memory_space<vmem>>, vector<1x128xf32>
    %4 = vector.broadcast %3 : vector<1x128xf32> to vector<16x128xf32>
    %5 = arith.addf %2, %4 : vector<16x128xf32>
    %c0_5 = arith.constant 0 : index
    %c0_6 = arith.constant 0 : index
    %6 = vector.load %arg6[%c0_5, %c0_6] : memref<16x128xf32, #tpu.memory_space<vmem>>, vector<16x128xf32>
    tpu.vector_store %arg6[%c0_5, %c0_6], %5 {strides = array<i32>} : memref<16x128xf32, #tpu.memory_space<vmem>>, vector<16x128xf32>,
    return
  }
  func.func @transform_0(%arg0: i32, %arg1: i32, %arg2: i32) -> (i32, i32) {
    %c0_i32 = arith.constant 0 : i32
    return %arg1, %arg2 : i32, i32
  }
  func.func @transform_1(%arg0: i32, %arg1: i32, %arg2: i32) -> (i32, i32) {
    %c0_i32 = arith.constant 0 : i32
    return %arg2, %arg0 : i32, i32
  }
  func.func @transform_2(%arg0: i32, %arg1: i32, %arg2: i32) -> (i32, i32) {
    %c0_i32 = arith.constant 0 : i32
    %c0_i32_0 = arith.constant 0 : i32
    return %c0_i32, %arg0 : i32, i32
  }
  func.func @transform_3(%arg0: i32, %arg1: i32, %arg2: i32) -> (i32, i32) {
    %c0_i32 = arith.constant 0 : i32
    return %arg1, %arg0 : i32, i32
  }
}

</mosaic_0001>

<llo_original>
// kernel: tpu_custom_call.1
$region0: #{tpu_custom_call.1}
  #allocation0 [shape = 'u32[]', space=smem, size = 0x4, offset = 0x4, fixed_abs, tag = 'smem constant byte address 0x4 - core index']
  #allocation1 [shape = 'u32[72,128]{1,0:T(1,128)}', space=vmem, size = 0x9000, scoped, tag = 'internal scratch']
  %s0 = inlined_call_operand.hbm [shape: f32[16,32], index: 0, kind: input, shape index: {}]
  %s1 = inlined_call_operand.hbm [shape: f32[32,128], index: 1, kind: input, shape index: {}]
  %s2 = inlined_call_operand.vmem [shape: f32[1,128], index: 2, kind: input, shape index: {}]
  %s3 = inlined_call_operand.hbm [shape: f32[16,128], index: 3, kind: output, shape index: {}]
  %s4 = sld [smem:[#allocation0]]
  $region30: #{tpu_custom_call.1} parent=0
    _
  %s6 = ssub.s32 1, %s4
  %s7 = scalar_select 0, %s6, %s4
  $region1: #{tpu_custom_call.1} parent=0
    #allocation2 [shape = 'u8[8192]{0}', space=vmem, size = 0x2000, scoped, tag = 'input window, operand 0, single buffered']
    #allocation3 [shape = 's32[1]{0}', space=sflag, size = 0x4, scoped, tag = 'scoped memory for tpu_custom_call.1']
    #allocation4 [shape = 's32[1]{0}', space=sflag, size = 0x4, scoped, tag = 'scoped memory for tpu_custom_call.1']
    #allocation5 [shape = 'u8[16384]{0}', space=vmem, size = 0x4000, scoped, tag = 'input window, operand 1, single buffered']
    #allocation6 [shape = 's32[1]{0}', space=sflag, size = 0x4, scoped, tag = 'scoped memory for tpu_custom_call.1']
    #allocation7 [shape = 'u8[8192]{0}', space=vmem, size = 0x2000, scoped, tag = 'output window, operand 0, single buffered']
    %8 = vsyncpa [#allocation3], 0
    %9 = vsyncpa [#allocation6], 0
    %10 = vsyncpa [#allocation4], 0
    // Predicated region
    $region2: #{tpu_custom_call.1} parent=1 // pred_check
      _
    $region3: #{tpu_custom_call.1} parent=1 // pred_check_branch
      %12 = sbr.rel (0) target = $region5
    $region4: #{tpu_custom_call.1} parent=1 // pred_region
      %14 = vsyncadd [#allocation3], 0
      %s15 = sshll.u32 %s0, 4
      %s16 = int_to_ptr.hbm [resolvable:$true] %s15
      %s17 = sshll.u32 [#allocation2], 4
      %s18 = int_to_ptr.vmem [resolvable:$true] %s17
      %23 = dma.hbm_to_vmem [thread:$0]  %s16, 256, %s18, [#allocation3], 128, 128, 8
    $region5: #{tpu_custom_call.1} parent=1 // pred_fallthru
      _
    // Predicated region
    $region6: #{tpu_custom_call.1} parent=1 // pred_check
      _
    $region7: #{tpu_custom_call.1} parent=1 // pred_check_branch
      %25 = sbr.rel (0) target = $region9
    $region8: #{tpu_custom_call.1} parent=1 // pred_region
      %27 = vsyncadd [#allocation6], 0
      %s28 = sshll.u32 %s1, 4
      %s29 = int_to_ptr.hbm [resolvable:$true] %s28
      %s30 = sshll.u32 [#allocation5], 4
      %s31 = int_to_ptr.vmem [resolvable:$true] %s30
      %36 = dma.hbm_to_vmem [thread:$0]  %s29, 512, %s31, [#allocation6], 128, 128, 8
    $region9: #{tpu_custom_call.1} parent=1 // pred_fallthru
      _
    // Predicated region
    $region10: #{tpu_custom_call.1} parent=1 // pred_check
      _
    $region11: #{tpu_custom_call.1} parent=1 // pred_check_branch
      %38 = sbr.rel (0) target = $region13
    $region12: #{tpu_custom_call.1} parent=1 // pred_region
      _
    $region13: #{tpu_custom_call.1} parent=1 // pred_fallthru
      _
    // Predicated region
    $region14: #{tpu_custom_call.1} parent=1 // pred_check
      _
    $region15: #{tpu_custom_call.1} parent=1 // pred_check_branch
      %40 = sbr.rel (0) target = $region17
    $region16: #{tpu_custom_call.1} parent=1 // pred_region
      %42 = dma.done [#allocation3], 256
    $region17: #{tpu_custom_call.1} parent=1 // pred_fallthru
      _
    // Predicated region
    $region18: #{tpu_custom_call.1} parent=1 // pred_check
      _
    $region19: #{tpu_custom_call.1} parent=1 // pred_check_branch
      %44 = sbr.rel (0) target = $region21
    $region20: #{tpu_custom_call.1} parent=1 // pred_region
      %46 = dma.done [#allocation6], 512
    $region21: #{tpu_custom_call.1} parent=1 // pred_fallthru
      _
    %v47 = vld [vmem:[#allocation2] sm:$0xff]
    %v48 = vld [vmem:[#allocation2 + $0x8] sm:$0xff]
    %v49 = vld [vmem:[#allocation5] sm:$0xff]
    %v50 = vld [vmem:[#allocation5 + $0x8] sm:$0xff]
    %v51 = vld [vmem:[#allocation5 + $0x10] sm:$0xff]
    %v52 = vld [vmem:[#allocation5 + $0x18] sm:$0xff]
    %v53 = vld [vmem:[%s2] sm:$0x1]
    %v55 = vperm.slane %v53, 0
    %vm57 = vcmask 261120
    %v59 = vsel %vm57, %v47, 0
    %v62 = vsel %vm57, %v48, 0
    %64 = vmatpush.msra.mxu0 0.0
    %65 = vmatpush.msra.mxu0 0.0
    %66 = vmatpush.msra.mxu0 0.0
    %67 = vmatpush.msra.mxu0 0.0
    %68 = vmatpush.msra.mxu0 0.0
    %69 = vmatpush.msra.mxu0 0.0
    %70 = vmatpush.msra.mxu0 0.0
    %71 = vmatpush.msra.mxu0 0.0
    %72 = vmatpush.msra.mxu0 0.0
    %73 = vmatpush.msra.mxu0 0.0
    %74 = vmatpush.msra.mxu0 0.0
    %75 = vmatpush.msra.mxu0 0.0
    %76 = vmatpush.msra.mxu0 %v52
    %77 = vmatpush.msra.mxu0 %v51
    %78 = vmatpush.msra.mxu0 %v50
    %79 = vmatpush.msra.mxu0 %v49
    %80 = vmatmul.f32.gmra.mxu0 %v59
    %v81 = vpop.f32.mrf.mxu0
    %v82 = vadd.f32 %v55, %v81
    %83 = vmatmul.f32.gmra.mxu0 %v62
    %v84 = vpop.f32.mrf.mxu0
    %v85 = vadd.f32 %v55, %v84
    %86 = vdwg.mxu0
    %87 = vst [vmem:[#allocation7] sm:$0xff] %v82
    %88 = vst [vmem:[#allocation7 + $0x8] sm:$0xff] %v85
    // Predicated region
    $region22: #{tpu_custom_call.1} parent=1 // pred_check
      _
    $region23: #{tpu_custom_call.1} parent=1 // pred_check_branch
      %90 = sbr.rel (0) target = $region25
    $region24: #{tpu_custom_call.1} parent=1 // pred_region
      %92 = vsyncadd [#allocation4], 0
      %s93 = sshll.u32 [#allocation7], 4
      %s94 = int_to_ptr.vmem [resolvable:$true] %s93
      %s95 = sshll.u32 %s3, 4
      %s96 = int_to_ptr.hbm [resolvable:$true] %s95
      %101 = dma.vmem_to_hbm [thread:$0]  %s94, 256, %s96, [#allocation4], 128, 128, 8
    $region25: #{tpu_custom_call.1} parent=1 // pred_fallthru
      _
    // Predicated region
    $region26: #{tpu_custom_call.1} parent=1 // pred_check
      _
    $region27: #{tpu_custom_call.1} parent=1 // pred_check_branch
      %103 = sbr.rel (0) target = $region29
    $region28: #{tpu_custom_call.1} parent=1 // pred_region
      %105 = dma.done [#allocation4], 256
    $region29: #{tpu_custom_call.1} parent=1 // pred_fallthru
      _
    %106 = vsyncpa [#allocation3], 1
    %107 = vsyncpa [#allocation6], 1
    %108 = vsyncpa [#allocation4], 1

</llo_original>
